<compile_context>
chip_gen: v5e
topology: v5e:2x2
jax: 0.10.0
libtpu: 0.0.40
codegen_flags: <defaults>
</compile_context>

<pallas_src>
import jax
import jax.numpy as jnp
from jax.experimental import pallas as pl
from jax.experimental.pallas import tpu as pltpu

EPS = 1e-5
VMEM_LIMIT_BYTES = 48 * 1024 * 1024  # within v7x's 64 MiB physical VMEM


def _round_up(x, m):
    return ((x + m - 1) // m) * m


def _choose_tb(batch):
    """Batch-tile size: multiple of 8 sublanes, large enough to fill the MXU M
    dimension for real batch sizes."""
    if batch >= 512:
        return 512
    if batch >= 256:
        return 256
    if batch >= 128:
        return 128
    return _round_up(batch, 8)


def _dot_bf16(a_f32, w_bf16):
    """MXU matmul with bf16 operands and f32 accumulation."""
    return jnp.dot(a_f32.astype(jnp.bfloat16), w_bf16,
                   preferred_element_type=jnp.float32)


# --------------------------------------------------------------------------
# Kernel 1: Linear(D,128) + ReLU, plus masked per-tile BN partial statistics.
# --------------------------------------------------------------------------
def encode_stats_kernel(n_ref,            # scalar prefetch: [valid_rows] (SMEM)
                        x_ref, w1_ref, b1_ref,
                        h1_ref, psum_ref, psq_ref):
    h = _dot_bf16(x_ref[...], w1_ref[...]) + b1_ref[...]
    h = jnp.maximum(h, 0.0)
    h1_ref[...] = h

    tb = h.shape[0]
    row = jax.lax.broadcasted_iota(jnp.int32, (tb, 1), 0) + pl.program_id(0) * tb
    mask = (row < n_ref[0]).astype(jnp.float32)        # exclude padded rows
    hm = h * mask
    s = jnp.sum(hm, axis=0, keepdims=True)              # (1, 128)
    sq = jnp.sum(hm * hm, axis=0, keepdims=True)         # (1, 128)
    # Replicate across the 8 sublanes of the (1, 8, 128) output block.
    psum_ref[...] = jnp.broadcast_to(s[None], psum_ref.shape)
    psq_ref[...] = jnp.broadcast_to(sq[None], psq_ref.shape)


# --------------------------------------------------------------------------
# Kernel 2: BatchNorm (with precomputed full-batch stats) + rest of the model.
# --------------------------------------------------------------------------
def decode_kernel(h1_ref, mean_ref, inv_ref, gamma_ref, beta_ref,
                  w2_ref, b2_ref, w3_ref, b3_ref,
                  w4_ref, b4_ref, w5_ref, b5_ref, w6_ref, b6_ref,
                  recon_ref, emb_ref):
    # BatchNorm1d(128): normalize with batch stats, then affine.
    h = (h1_ref[...] - mean_ref[...]) * inv_ref[...] * gamma_ref[...] + beta_ref[...]

    # Linear(128, 64) + ReLU
    h = jnp.maximum(_dot_bf16(h, w2_ref[...]) + b2_ref[...], 0.0)

    # Linear(64, 32) -> embeddings (padded to 128 lanes; extra cols are zero)
    emb = _dot_bf16(h, w3_ref[...]) + b3_ref[...]
    emb_ref[...] = emb.astype(emb_ref.dtype)

    # Linear(32, 64) + ReLU  (zero-padded emb lanes x zero-padded w4 rows)
    d = jnp.maximum(_dot_bf16(emb, w4_ref[...]) + b4_ref[...], 0.0)

    # Linear(64, 128) + ReLU
    d = jnp.maximum(_dot_bf16(d, w5_ref[...]) + b5_ref[...], 0.0)

    # Linear(128, D) -> reconstruction (padded to Dp lanes; extra cols zero)
    recon = _dot_bf16(d, w6_ref[...]) + b6_ref[...]
    recon_ref[...] = recon.astype(recon_ref.dtype)


# --------------------------------------------------------------------------
# Wrapper
# --------------------------------------------------------------------------
def autoencoder_forward(x, params):
    """x: (B, D) float32. Returns (reconstructed (B, D), embeddings (B, 32))."""
    B, D = x.shape
    Dp = _round_up(D, 128)
    TB = _choose_tb(B)
    B_pad = _round_up(B, TB)
    n_tiles = B_pad // TB

    f32, bf16 = jnp.float32, jnp.bfloat16

    # Lane/sublane-aligned, zero-padded operands (done under jit; for real
    # workloads pre-pad the weights once at init time).
    x_p = jnp.zeros((B_pad, Dp), f32).at[:B, :D].set(x)
    w1 = jnp.zeros((Dp, 128), f32).at[:D, :].set(params["w1"]).astype(bf16)
    w2 = params["w2"].astype(bf16)
    w3 = jnp.zeros((64, 128), f32).at[:, :32].set(params["w3"]).astype(bf16)
    b3 = jnp.zeros((1, 128), f32).at[:, :32].set(params["b3"])
    w4 = jnp.zeros((128, 64), f32).at[:32, :].set(params["w4"]).astype(bf16)
    w5 = params["w5"].astype(bf16)
    w6 = jnp.zeros((128, Dp), f32).at[:, :D].set(params["w6"]).astype(bf16)
    b6 = jnp.zeros((1, Dp), f32).at[:, :D].set(params["b6"])
    n_valid = jnp.array([B], jnp.int32)

    compiler_params = pltpu.CompilerParams(
        dimension_semantics=("parallel",),
        vmem_limit_bytes=VMEM_LIMIT_BYTES,
    )

    # ---------------- pass 1: Linear1 + ReLU + BN partial stats ----------------
    cost1 = pl.CostEstimate(
        flops=2 * B_pad * Dp * 128,
        transcendentals=0,
        bytes_accessed=int(B_pad * Dp * 4 + Dp * 128 * 2 + 128 * 4
                           + B_pad * 128 * 4 + 2 * n_tiles * 8 * 128 * 4),
    )
    h1, psum, psq = pl.pallas_call(
        encode_stats_kernel,
        out_shape=(
            jax.ShapeDtypeStruct((B_pad, 128), f32),       # h1
            jax.ShapeDtypeStruct((n_tiles, 8, 128), f32),  # per-tile sum
            jax.ShapeDtypeStruct((n_tiles, 8, 128), f32),  # per-tile sum of sq
        ),
        grid_spec=pltpu.PrefetchScalarGridSpec(
            num_scalar_prefetch=1,
            grid=(n_tiles,),
            in_specs=[
                pl.BlockSpec((TB, Dp), lambda i, n: (i, 0)),    # x tile
                pl.BlockSpec((Dp, 128), lambda i, n: (0, 0)),   # w1 (resident)
                pl.BlockSpec((1, 128), lambda i, n: (0, 0)),    # b1
            ],
            out_specs=[
                pl.BlockSpec((TB, 128), lambda i, n: (i, 0)),
                pl.BlockSpec((1, 8, 128), lambda i, n: (i, 0, 0)),
                pl.BlockSpec((1, 8, 128), lambda i, n: (i, 0, 0)),
            ],
        ),
        compiler_params=compiler_params,
        cost_estimate=cost1,
    )(n_valid, x_p, w1, params["b1"])

    # ---------------- tiny XLA reduction: full-batch BN statistics -------------
    inv_b = 1.0 / jnp.float32(B)
    mean = jnp.sum(psum[:, 0, :], axis=0, keepdims=True) * inv_b      # (1, 128)
    ex2 = jnp.sum(psq[:, 0, :], axis=0, keepdims=True) * inv_b
    var = jnp.maximum(ex2 - mean * mean, 0.0)                          # biased var
    inv_std = jax.lax.rsqrt(var + EPS)
    # TODO(synk): BatchNorm1d running-stat updates are a training side effect
    # not returned by forward(); they are not materialized here.

    # ---------------- pass 2: BN + remaining encoder/decoder layers ------------
    cost2 = pl.CostEstimate(
        flops=2 * B_pad * (128 * 64 + 64 * 128 + 128 * 64 + 64 * 128 + 128 * Dp),
        transcendentals=0,
        bytes_accessed=int(B_pad * 128 * 4
                           + 2 * (128 * 64 + 64 * 128 + 128 * 64 + 64 * 128 + 128 * Dp)
                           + B_pad * Dp * 4 + B_pad * 128 * 4),
    )
    const = lambda i: (0, 0)
    tile = lambda i: (i, 0)
    recon_p, emb_p = pl.pallas_call(
        decode_kernel,
        out_shape=(
            jax.ShapeDtypeStruct((B_pad, Dp), f32),    # reconstructed (padded)
            jax.ShapeDtypeStruct((B_pad, 128), f32),   # embeddings (padded)
        ),
        grid_spec=pltpu.PrefetchScalarGridSpec(
            num_scalar_prefetch=0,
            grid=(n_tiles,),
            in_specs=[
                pl.BlockSpec((TB, 128), tile),     # h1 tile
                pl.BlockSpec((1, 128), const),     # mean
                pl.BlockSpec((1, 128), const),     # inv_std
                pl.BlockSpec((1, 128), const),     # gamma
                pl.BlockSpec((1, 128), const),     # beta
                pl.BlockSpec((128, 64), const),    # w2
                pl.BlockSpec((1, 64), const),      # b2
                pl.BlockSpec((64, 128), const),    # w3 (padded cols)
                pl.BlockSpec((1, 128), const),     # b3 (padded)
                pl.BlockSpec((128, 64), const),    # w4 (padded rows)
                pl.BlockSpec((1, 64), const),      # b4
                pl.BlockSpec((64, 128), const),    # w5
                pl.BlockSpec((1, 128), const),     # b5
                pl.BlockSpec((128, Dp), const),    # w6 (padded cols)
                pl.BlockSpec((1, Dp), const),      # b6 (padded)
            ],
            out_specs=[
                pl.BlockSpec((TB, Dp), tile),
                pl.BlockSpec((TB, 128), tile),
            ],
        ),
        compiler_params=compiler_params,
        cost_estimate=cost2,
    )(h1, mean, inv_std, params["gamma"], params["beta"],
      w2, params["b2"], w3, b3, w4, params["b4"], w5, params["b5"], w6, b6)

    return recon_p[:B, :D], emb_p[:B, :32]


# --------------------------------------------------------------------------
# Parameter init (PyTorch-style) and reference
# --------------------------------------------------------------------------
def _linear_init(key, fan_in, fan_out):
    kw, kb = jax.random.split(key)
    bound = 1.0 / jnp.sqrt(float(fan_in))
    w = jax.random.uniform(kw, (fan_in, fan_out), jnp.float32, -bound, bound)
    b = jax.random.uniform(kb, (1, fan_out), jnp.float32, -bound, bound)
    return w, b


def init_params(key, input_dim):
    keys = jax.random.split(key, 6)
    w1, b1 = _linear_init(keys[0], input_dim, 128)
    w2, b2 = _linear_init(keys[1], 128, 64)
    w3, b3 = _linear_init(keys[2], 64, 32)
    w4, b4 = _linear_init(keys[3], 32, 64)
    w5, b5 = _linear_init(keys[4], 64, 128)
    w6, b6 = _linear_init(keys[5], 128, input_dim)
    return dict(
        w1=w1, b1=b1,
        gamma=jnp.ones((1, 128), jnp.float32),   # BatchNorm1d default weight
        beta=jnp.zeros((1, 128), jnp.float32),   # BatchNorm1d default bias
        w2=w2, b2=b2, w3=w3, b3=b3,
        w4=w4, b4=b4, w5=w5, b5=b5, w6=w6, b6=b6,
    )


def _reference_forward(x, p):
    """Pure-JAX reference with the same bf16-operand / f32-accumulate policy."""
    def mm(a, w):
        return jnp.dot(a.astype(jnp.bfloat16), w.astype(jnp.bfloat16),
                       preferred_element_type=jnp.float32)
    h = jnp.maximum(mm(x, p["w1"]) + p["b1"], 0.0)
    mean = jnp.mean(h, axis=0, keepdims=True)
    var = jnp.mean((h - mean) ** 2, axis=0, keepdims=True)     # biased
    h = (h - mean) / jnp.sqrt(var + EPS) * p["gamma"] + p["beta"]
    h = jnp.maximum(mm(h, p["w2"]) + p["b2"], 0.0)
    emb = mm(h, p["w3"]) + p["b3"]
    d = jnp.maximum(mm(emb, p["w4"]) + p["b4"], 0.0)
    d = jnp.maximum(mm(d, p["w5"]) + p["b5"], 0.0)
    recon = mm(d, p["w6"]) + p["b6"]
    return recon, emb


if __name__ == "__main__":
    key = jax.random.PRNGKey(0)
    k_x, k_p = jax.random.split(key)

    batch, input_dim = 8, 64
    x = jax.random.normal(k_x, (batch, input_dim), jnp.float32)
    params = init_params(k_p, input_dim)

    recon, emb = jax.jit(autoencoder_forward)(x, params)
    jax.block_until_ready((recon, emb))

    ref_recon, ref_emb = _reference_forward(x, params)
    assert recon.shape == (batch, input_dim) and emb.shape == (batch, 32)
    assert jnp.allclose(recon, ref_recon, atol=1e-2, rtol=1e-2), (
        float(jnp.max(jnp.abs(recon - ref_recon))))
    assert jnp.allclose(emb, ref_emb, atol=1e-2, rtol=1e-2), (
        float(jnp.max(jnp.abs(emb - ref_emb))))

    print("KERNEL_OK")
</pallas_src>

<mosaic_0001>
module attributes {stable_mosaic.version = 11 : i64} {
  func.func @decode_kernel(%arg0: i32, %arg1: memref<8x128xf32, #tpu.memory_space<vmem>>, %arg2: memref<1x128xf32, #tpu.memory_space<vmem>>, %arg3: memref<1x128xf32, #tpu.memory_space<vmem>>, %arg4: memref<1x128xf32, #tpu.memory_space<vmem>>, %arg5: memref<1x128xf32, #tpu.memory_space<vmem>>, %arg6: memref<128x64xbf16, #tpu.memory_space<vmem>>, %arg7: memref<1x64xf32, #tpu.memory_space<vmem>>, %arg8: memref<64x128xbf16, #tpu.memory_space<vmem>>, %arg9: memref<1x128xf32, #tpu.memory_space<vmem>>, %arg10: memref<128x64xbf16, #tpu.memory_space<vmem>>, %arg11: memref<1x64xf32, #tpu.memory_space<vmem>>, %arg12: memref<64x128xbf16, #tpu.memory_space<vmem>>, %arg13: memref<1x128xf32, #tpu.memory_space<vmem>>, %arg14: memref<128x128xbf16, #tpu.memory_space<vmem>>, %arg15: memref<1x128xf32, #tpu.memory_space<vmem>>, %arg16: memref<8x128xf32, #tpu.memory_space<vmem>>, %arg17: memref<8x128xf32, #tpu.memory_space<vmem>>) attributes {dimension_semantics = [#tpu.dimension_semantics<parallel>], iteration_bounds = array<i64: 1>, scalar_prefetch = 0 : i64, scratch_operands = 0 : i64, tpu.core_type = #tpu.core_type<tc>, window_params = [{transform_indices = @transform_0, window_bounds = array<i64: 8, 128>}, {pipeline_mode = #tpu.pipeline_mode<synchronous>, transform_indices = @transform_1, window_bounds = array<i64: 1, 128>}, {pipeline_mode = #tpu.pipeline_mode<synchronous>, transform_indices = @transform_2, window_bounds = array<i64: 1, 128>}, {pipeline_mode = #tpu.pipeline_mode<synchronous>, transform_indices = @transform_3, window_bounds = array<i64: 1, 128>}, {pipeline_mode = #tpu.pipeline_mode<synchronous>, transform_indices = @transform_4, window_bounds = array<i64: 1, 128>}, {pipeline_mode = #tpu.pipeline_mode<synchronous>, transform_indices = @transform_5, window_bounds = array<i64: 128, 64>}, {pipeline_mode = #tpu.pipeline_mode<synchronous>, transform_indices = @transform_6, window_bounds = array<i64: 1, 64>}, {pipeline_mode = #tpu.pipeline_mode<synchronous>, transform_indices = @transform_7, window_bounds = array<i64: 64, 128>}, {pipeline_mode = #tpu.pipeline_mode<synchronous>, transform_indices = @transform_8, window_bounds = array<i64: 1, 128>}, {pipeline_mode = #tpu.pipeline_mode<synchronous>, transform_indices = @transform_9, window_bounds = array<i64: 128, 64>}, {pipeline_mode = #tpu.pipeline_mode<synchronous>, transform_indices = @transform_10, window_bounds = array<i64: 1, 64>}, {pipeline_mode = #tpu.pipeline_mode<synchronous>, transform_indices = @transform_11, window_bounds = array<i64: 64, 128>}, {pipeline_mode = #tpu.pipeline_mode<synchronous>, transform_indices = @transform_12, window_bounds = array<i64: 1, 128>}, {pipeline_mode = #tpu.pipeline_mode<synchronous>, transform_indices = @transform_13, window_bounds = array<i64: 128, 128>}, {pipeline_mode = #tpu.pipeline_mode<synchronous>, transform_indices = @transform_14, window_bounds = array<i64: 1, 128>}, {transform_indices = @transform_15, window_bounds = array<i64: 8, 128>}, {transform_indices = @transform_16, window_bounds = array<i64: 8, 128>}]} {
    %c0 = arith.constant 0 : index
    %c0_0 = arith.constant 0 : index
    %0 = vector.load %arg1[%c0, %c0_0] : memref<8x128xf32, #tpu.memory_space<vmem>>, vector<8x128xf32>
    %c0_1 = arith.constant 0 : index
    %c0_2 = arith.constant 0 : index
    %1 = vector.load %arg2[%c0_1, %c0_2] : memref<1x128xf32, #tpu.memory_space<vmem>>, vector<1x128xf32>
    %2 = vector.broadcast %1 : vector<1x128xf32> to vector<8x128xf32>
    %3 = arith.subf %0, %2 : vector<8x128xf32>
    %c0_3 = arith.constant 0 : index
    %c0_4 = arith.constant 0 : index
    %4 = vector.load %arg3[%c0_3, %c0_4] : memref<1x128xf32, #tpu.memory_space<vmem>>, vector<1x128xf32>
    %5 = vector.broadcast %4 : vector<1x128xf32> to vector<8x128xf32>
    %6 = arith.mulf %3, %5 : vector<8x128xf32>
    %c0_5 = arith.constant 0 : index
    %c0_6 = arith.constant 0 : index
    %7 = vector.load %arg4[%c0_5, %c0_6] : memref<1x128xf32, #tpu.memory_space<vmem>>, vector<1x128xf32>
    %8 = vector.broadcast %7 : vector<1x128xf32> to vector<8x128xf32>
    %9 = arith.mulf %6, %8 : vector<8x128xf32>
    %c0_7 = arith.constant 0 : index
    %c0_8 = arith.constant 0 : index
    %10 = vector.load %arg5[%c0_7, %c0_8] : memref<1x128xf32, #tpu.memory_space<vmem>>, vector<1x128xf32>
    %11 = vector.broadcast %10 : vector<1x128xf32> to vector<8x128xf32>
    %12 = arith.addf %9, %11 : vector<8x128xf32>
    %c0_9 = arith.constant 0 : index
    %c0_10 = arith.constant 0 : index
    %13 = vector.load %arg6[%c0_9, %c0_10] : memref<128x64xbf16, #tpu.memory_space<vmem>>, vector<128x64xbf16>
    %14 = arith.truncf %12 : vector<8x128xf32> to vector<8x128xbf16>
    %cst = arith.constant dense<0.000000e+00> : vector<8x64xf32>
    %15 = tpu.matmul %14, %13, %cst {dimension_numbers = #tpu.dot_dimension_numbers<[1], [0], [0], [1], [0, 0, 1, 1], [], []>} : vector<8x128xbf16>, vector<128x64xbf16>, vector<8x64xf32> -> vector<8x64xf32>
    %c0_11 = arith.constant 0 : index
    %c0_12 = arith.constant 0 : index
    %16 = vector.load %arg7[%c0_11, %c0_12] : memref<1x64xf32, #tpu.memory_space<vmem>>, vector<1x64xf32>
    %17 = vector.broadcast %16 : vector<1x64xf32> to vector<8x64xf32>
    %18 = arith.addf %15, %17 : vector<8x64xf32>
    %cst_13 = arith.constant 0.000000e+00 : f32
    %19 = vector.broadcast %cst_13 : f32 to vector<8x64xf32>
    %20 = arith.maximumf %18, %19 : vector<8x64xf32>
    %c0_14 = arith.constant 0 : index
    %c0_15 = arith.constant 0 : index
    %21 = vector.load %arg8[%c0_14, %c0_15] : memref<64x128xbf16, #tpu.memory_space<vmem>>, vector<64x128xbf16>
    %22 = arith.truncf %20 : vector<8x64xf32> to vector<8x64xbf16>
    %cst_16 = arith.constant dense<0.000000e+00> : vector<8x128xf32>
    %23 = tpu.matmul %22, %21, %cst_16 {dimension_numbers = #tpu.dot_dimension_numbers<[1], [0], [0], [1], [0, 0, 1, 1], [], []>} : vector<8x64xbf16>, vector<64x128xbf16>, vector<8x128xf32> -> vector<8x128xf32>
    %c0_17 = arith.constant 0 : index
    %c0_18 = arith.constant 0 : index
    %24 = vector.load %arg9[%c0_17, %c0_18] : memref<1x128xf32, #tpu.memory_space<vmem>>, vector<1x128xf32>
    %25 = vector.broadcast %24 : vector<1x128xf32> to vector<8x128xf32>
    %26 = arith.addf %23, %25 : vector<8x128xf32>
    %c0_19 = arith.constant 0 : index
    %c0_20 = arith.constant 0 : index
    %27 = vector.load %arg17[%c0_19, %c0_20] : memref<8x128xf32, #tpu.memory_space<vmem>>, vector<8x128xf32>
    tpu.vector_store %arg17[%c0_19, %c0_20], %26 {strides = array<i32>} : memref<8x128xf32, #tpu.memory_space<vmem>>, vector<8x128xf32>,
    %c0_21 = arith.constant 0 : index
    %c0_22 = arith.constant 0 : index
    %28 = vector.load %arg10[%c0_21, %c0_22] : memref<128x64xbf16, #tpu.memory_space<vmem>>, vector<128x64xbf16>
    %29 = arith.truncf %26 : vector<8x128xf32> to vector<8x128xbf16>
    %cst_23 = arith.constant dense<0.000000e+00> : vector<8x64xf32>
    %30 = tpu.matmul %29, %28, %cst_23 {dimension_numbers = #tpu.dot_dimension_numbers<[1], [0], [0], [1], [0, 0, 1, 1], [], []>} : vector<8x128xbf16>, vector<128x64xbf16>, vector<8x64xf32> -> vector<8x64xf32>
    %c0_24 = arith.constant 0 : index
    %c0_25 = arith.constant 0 : index
    %31 = vector.load %arg11[%c0_24, %c0_25] : memref<1x64xf32, #tpu.memory_space<vmem>>, vector<1x64xf32>
    %32 = vector.broadcast %31 : vector<1x64xf32> to vector<8x64xf32>
    %33 = arith.addf %30, %32 : vector<8x64xf32>
    %cst_26 = arith.constant 0.000000e+00 : f32
    %34 = vector.broadcast %cst_26 : f32 to vector<8x64xf32>
    %35 = arith.maximumf %33, %34 : vector<8x64xf32>
    %c0_27 = arith.constant 0 : index
    %c0_28 = arith.constant 0 : index
    %36 = vector.load %arg12[%c0_27, %c0_28] : memref<64x128xbf16, #tpu.memory_space<vmem>>, vector<64x128xbf16>
    %37 = arith.truncf %35 : vector<8x64xf32> to vector<8x64xbf16>
    %cst_29 = arith.constant dense<0.000000e+00> : vector<8x128xf32>
    %38 = tpu.matmul %37, %36, %cst_29 {dimension_numbers = #tpu.dot_dimension_numbers<[1], [0], [0], [1], [0, 0, 1, 1], [], []>} : vector<8x64xbf16>, vector<64x128xbf16>, vector<8x128xf32> -> vector<8x128xf32>
    %c0_30 = arith.constant 0 : index
    %c0_31 = arith.constant 0 : index
    %39 = vector.load %arg13[%c0_30, %c0_31] : memref<1x128xf32, #tpu.memory_space<vmem>>, vector<1x128xf32>
    %40 = vector.broadcast %39 : vector<1x128xf32> to vector<8x128xf32>
    %41 = arith.addf %38, %40 : vector<8x128xf32>
    %cst_32 = arith.constant 0.000000e+00 : f32
    %42 = vector.broadcast %cst_32 : f32 to vector<8x128xf32>
    %43 = arith.maximumf %41, %42 : vector<8x128xf32>
    %c0_33 = arith.constant 0 : index
    %c0_34 = arith.constant 0 : index
    %44 = vector.load %arg14[%c0_33, %c0_34] : memref<128x128xbf16, #tpu.memory_space<vmem>>, vector<128x128xbf16>
    %45 = arith.truncf %43 : vector<8x128xf32> to vector<8x128xbf16>
    %cst_35 = arith.constant dense<0.000000e+00> : vector<8x128xf32>
    %46 = tpu.matmul %45, %44, %cst_35 {dimension_numbers = #tpu.dot_dimension_numbers<[1], [0], [0], [1], [0, 0, 1, 1], [], []>} : vector<8x128xbf16>, vector<128x128xbf16>, vector<8x128xf32> -> vector<8x128xf32>
    %c0_36 = arith.constant 0 : index
    %c0_37 = arith.constant 0 : index
    %47 = vector.load %arg15[%c0_36, %c0_37] : memref<1x128xf32, #tpu.memory_space<vmem>>, vector<1x128xf32>
    %48 = vector.broadcast %47 : vector<1x128xf32> to vector<8x128xf32>
    %49 = arith.addf %46, %48 : vector<8x128xf32>
    %c0_38 = arith.constant 0 : index
    %c0_39 = arith.constant 0 : index
    %50 = vector.load %arg16[%c0_38, %c0_39] : memref<8x128xf32, #tpu.memory_space<vmem>>, vector<8x128xf32>
    tpu.vector_store %arg16[%c0_38, %c0_39], %49 {strides = array<i32>} : memref<8x128xf32, #tpu.memory_space<vmem>>, vector<8x128xf32>,
    return
  }
  func.func @transform_0(%arg0: i32) -> (i32, i32) {
    %c0_i32 = arith.constant 0 : i32
    %c0_i32_0 = arith.constant 0 : i32
    return %arg0, %c0_i32 : i32, i32
  }
  func.func @transform_1(%arg0: i32) -> (i32, i32) {
    %c0_i32 = arith.constant 0 : i32
    %c0_i32_0 = arith.constant 0 : i32
    %c0_i32_1 = arith.constant 0 : i32
    return %c0_i32, %c0_i32_0 : i32, i32
  }
  func.func @transform_2(%arg0: i32) -> (i32, i32) {
    %c0_i32 = arith.constant 0 : i32
    %c0_i32_0 = arith.constant 0 : i32
    %c0_i32_1 = arith.constant 0 : i32
    return %c0_i32, %c0_i32_0 : i32, i32
  }
  func.func @transform_3(%arg0: i32) -> (i32, i32) {
    %c0_i32 = arith.constant 0 : i32
    %c0_i32_0 = arith.constant 0 : i32
    %c0_i32_1 = arith.constant 0 : i32
    return %c0_i32, %c0_i32_0 : i32, i32
  }
  func.func @transform_4(%arg0: i32) -> (i32, i32) {
    %c0_i32 = arith.constant 0 : i32
    %c0_i32_0 = arith.constant 0 : i32
    %c0_i32_1 = arith.constant 0 : i32
    return %c0_i32, %c0_i32_0 : i32, i32
  }
  func.func @transform_5(%arg0: i32) -> (i32, i32) {
    %c0_i32 = arith.constant 0 : i32
    %c0_i32_0 = arith.constant 0 : i32
    %c0_i32_1 = arith.constant 0 : i32
    return %c0_i32, %c0_i32_0 : i32, i32
  }
  func.func @transform_6(%arg0: i32) -> (i32, i32) {
    %c0_i32 = arith.constant 0 : i32
    %c0_i32_0 = arith.constant 0 : i32
    %c0_i32_1 = arith.constant 0 : i32
    return %c0_i32, %c0_i32_0 : i32, i32
  }
  func.func @transform_7(%arg0: i32) -> (i32, i32) {
    %c0_i32 = arith.constant 0 : i32
    %c0_i32_0 = arith.constant 0 : i32
    %c0_i32_1 = arith.constant 0 : i32
    return %c0_i32, %c0_i32_0 : i32, i32
  }
  func.func @transform_8(%arg0: i32) -> (i32, i32) {
    %c0_i32 = arith.constant 0 : i32
    %c0_i32_0 = arith.constant 0 : i32
    %c0_i32_1 = arith.constant 0 : i32
    return %c0_i32, %c0_i32_0 : i32, i32
  }
  func.func @transform_9(%arg0: i32) -> (i32, i32) {
    %c0_i32 = arith.constant 0 : i32
    %c0_i32_0 = arith.constant 0 : i32
    %c0_i32_1 = arith.constant 0 : i32
    return %c0_i32, %c0_i32_0 : i32, i32
  }
  func.func @transform_10(%arg0: i32) -> (i32, i32) {
    %c0_i32 = arith.constant 0 : i32
    %c0_i32_0 = arith.constant 0 : i32
    %c0_i32_1 = arith.constant 0 : i32
    return %c0_i32, %c0_i32_0 : i32, i32
  }
  func.func @transform_11(%arg0: i32) -> (i32, i32) {
    %c0_i32 = arith.constant 0 : i32
    %c0_i32_0 = arith.constant 0 : i32
    %c0_i32_1 = arith.constant 0 : i32
    return %c0_i32, %c0_i32_0 : i32, i32
  }
  func.func @transform_12(%arg0: i32) -> (i32, i32) {
    %c0_i32 = arith.constant 0 : i32
    %c0_i32_0 = arith.constant 0 : i32
    %c0_i32_1 = arith.constant 0 : i32
    return %c0_i32, %c0_i32_0 : i32, i32
  }
  func.func @transform_13(%arg0: i32) -> (i32, i32) {
    %c0_i32 = arith.constant 0 : i32
    %c0_i32_0 = arith.constant 0 : i32
    %c0_i32_1 = arith.constant 0 : i32
    return %c0_i32, %c0_i32_0 : i32, i32
  }
  func.func @transform_14(%arg0: i32) -> (i32, i32) {
    %c0_i32 = arith.constant 0 : i32
    %c0_i32_0 = arith.constant 0 : i32
    %c0_i32_1 = arith.constant 0 : i32
    return %c0_i32, %c0_i32_0 : i32, i32
  }
  func.func @transform_15(%arg0: i32) -> (i32, i32) {
    %c0_i32 = arith.constant 0 : i32
    %c0_i32_0 = arith.constant 0 : i32
    return %arg0, %c0_i32 : i32, i32
  }
  func.func @transform_16(%arg0: i32) -> (i32, i32) {
    %c0_i32 = arith.constant 0 : i32
    %c0_i32_0 = arith.constant 0 : i32
    return %arg0, %c0_i32 : i32, i32
  }
}

module attributes {stable_mosaic.version = 11 : i64} {
  func.func @encode_stats_kernel(%arg0: i32, %arg1: memref<1xi32, #tpu.memory_space<smem>>, %arg2: memref<8x128xf32, #tpu.memory_space<vmem>>, %arg3: memref<128x128xbf16, #tpu.memory_space<vmem>>, %arg4: memref<1x128xf32, #tpu.memory_space<vmem>>, %arg5: memref<8x128xf32, #tpu.memory_space<vmem>>, %arg6: memref<1x8x128xf32, #tpu.memory_space<vmem>>, %arg7: memref<1x8x128xf32, #tpu.memory_space<vmem>>) attributes {dimension_semantics = [#tpu.dimension_semantics<parallel>], iteration_bounds = array<i64: 1>, scalar_prefetch = 1 : i64, scratch_operands = 0 : i64, tpu.core_type = #tpu.core_type<tc>, window_params = [{transform_indices = @transform_0, window_bounds = array<i64: 8, 128>}, {pipeline_mode = #tpu.pipeline_mode<synchronous>, transform_indices = @transform_1, window_bounds = array<i64: 128, 128>}, {pipeline_mode = #tpu.pipeline_mode<synchronous>, transform_indices = @transform_2, window_bounds = array<i64: 1, 128>}, {transform_indices = @transform_3, window_bounds = array<i64: 8, 128>}, {transform_indices = @transform_4, window_bounds = array<i64: 1, 8, 128>}, {transform_indices = @transform_5, window_bounds = array<i64: 1, 8, 128>}]} {
    %c0 = arith.constant 0 : index
    %c0_0 = arith.constant 0 : index
    %0 = vector.load %arg2[%c0, %c0_0] : memref<8x128xf32, #tpu.memory_space<vmem>>, vector<8x128xf32>
    %c0_1 = arith.constant 0 : index
    %c0_2 = arith.constant 0 : index
    %1 = vector.load %arg3[%c0_1, %c0_2] : memref<128x128xbf16, #tpu.memory_space<vmem>>, vector<128x128xbf16>
    %2 = arith.truncf %0 : vector<8x128xf32> to vector<8x128xbf16>
    %cst = arith.constant dense<0.000000e+00> : vector<8x128xf32>
    %3 = tpu.matmul %2, %1, %cst {dimension_numbers = #tpu.dot_dimension_numbers<[1], [0], [0], [1], [0, 0, 1, 1], [], []>} : vector<8x128xbf16>, vector<128x128xbf16>, vector<8x128xf32> -> vector<8x128xf32>
    %c0_3 = arith.constant 0 : index
    %c0_4 = arith.constant 0 : index
    %4 = vector.load %arg4[%c0_3, %c0_4] : memref<1x128xf32, #tpu.memory_space<vmem>>, vector<1x128xf32>
    %5 = vector.broadcast %4 : vector<1x128xf32> to vector<8x128xf32>
    %6 = arith.addf %3, %5 : vector<8x128xf32>
    %cst_5 = arith.constant 0.000000e+00 : f32
    %7 = vector.broadcast %cst_5 : f32 to vector<8x128xf32>
    %8 = arith.maximumf %6, %7 : vector<8x128xf32>
    %c0_6 = arith.constant 0 : index
    %c0_7 = arith.constant 0 : index
    %9 = vector.load %arg5[%c0_6, %c0_7] : memref<8x128xf32, #tpu.memory_space<vmem>>, vector<8x128xf32>
    tpu.vector_store %arg5[%c0_6, %c0_7], %8 {strides = array<i32>} : memref<8x128xf32, #tpu.memory_space<vmem>>, vector<8x128xf32>,
    %10 = tpu.iota {dimensions = array<i32: 0>} : vector<8x1xi32>
    %c8_i32 = arith.constant 8 : i32
    %11 = arith.muli %arg0, %c8_i32 : i32
    %12 = vector.broadcast %11 : i32 to vector<8x1xi32>
    %13 = arith.addi %10, %12 : vector<8x1xi32>
    %c0_8 = arith.constant 0 : index
    %14 = memref.load %arg1[%c0_8] : memref<1xi32, #tpu.memory_space<smem>>
    %15 = vector.broadcast %14 : i32 to vector<8x1xi32>
    %16 = arith.cmpi slt, %13, %15 : vector<8x1xi32>
    %17 = arith.extui %16 : vector<8x1xi1> to vector<8x1xi32>
    %18 = arith.sitofp %17 : vector<8x1xi32> to vector<8x1xf32>
    %19 = vector.broadcast %18 : vector<8x1xf32> to vector<8x128xf32>
    %20 = arith.mulf %8, %19 : vector<8x128xf32>
    %cst_9 = arith.constant dense<0.000000e+00> : vector<128xf32>
    %21 = vector.multi_reduction <add>, %20, %cst_9 [0] : vector<8x128xf32> to vector<128xf32>
    %22 = vector.shape_cast %21 : vector<128xf32> to vector<1x128xf32>
    %23 = arith.mulf %20, %20 : vector<8x128xf32>
    %cst_10 = arith.constant dense<0.000000e+00> : vector<128xf32>
    %24 = vector.multi_reduction <add>, %23, %cst_10 [0] : vector<8x128xf32> to vector<128xf32>
    %25 = vector.shape_cast %24 : vector<128xf32> to vector<1x128xf32>
    %26 = vector.shape_cast %22 : vector<1x128xf32> to vector<1x1x128xf32>
    %27 = vector.shape_cast %26 : vector<1x1x128xf32> to vector<1x1x128xf32>
    %28 = vector.broadcast %27 : vector<1x1x128xf32> to vector<1x8x128xf32>
    %c0_11 = arith.constant 0 : index
    %c0_12 = arith.constant 0 : index
    %c0_13 = arith.constant 0 : index
    %29 = vector.load %arg6[%c0_11, %c0_12, %c0_13] : memref<1x8x128xf32, #tpu.memory_space<vmem>>, vector<1x8x128xf32>
    tpu.vector_store %arg6[%c0_11, %c0_12, %c0_13], %28 {strides = array<i32>} : memref<1x8x128xf32, #tpu.memory_space<vmem>>, vector<1x8x128xf32>,
    %30 = vector.shape_cast %25 : vector<1x128xf32> to vector<1x1x128xf32>
    %31 = vector.shape_cast %30 : vector<1x1x128xf32> to vector<1x1x128xf32>
    %32 = vector.broadcast %31 : vector<1x1x128xf32> to vector<1x8x128xf32>
    %c0_14 = arith.constant 0 : index
    %c0_15 = arith.constant 0 : index
    %c0_16 = arith.constant 0 : index
    %33 = vector.load %arg7[%c0_14, %c0_15, %c0_16] : memref<1x8x128xf32, #tpu.memory_space<vmem>>, vector<1x8x128xf32>
    tpu.vector_store %arg7[%c0_14, %c0_15, %c0_16], %32 {strides = array<i32>} : memref<1x8x128xf32, #tpu.memory_space<vmem>>, vector<1x8x128xf32>,
    return
  }
  func.func @transform_0(%arg0: i32, %arg1: memref<1xi32, #tpu.memory_space<smem>>) -> (i32, i32) {
    %c0_i32 = arith.constant 0 : i32
    %c0_i32_0 = arith.constant 0 : i32
    return %arg0, %c0_i32 : i32, i32
  }
  func.func @transform_1(%arg0: i32, %arg1: memref<1xi32, #tpu.memory_space<smem>>) -> (i32, i32) {
    %c0_i32 = arith.constant 0 : i32
    %c0_i32_0 = arith.constant 0 : i32
    %c0_i32_1 = arith.constant 0 : i32
    return %c0_i32, %c0_i32_0 : i32, i32
  }
  func.func @transform_2(%arg0: i32, %arg1: memref<1xi32, #tpu.memory_space<smem>>) -> (i32, i32) {
    %c0_i32 = arith.constant 0 : i32
    %c0_i32_0 = arith.constant 0 : i32
    %c0_i32_1 = arith.constant 0 : i32
    return %c0_i32, %c0_i32_0 : i32, i32
  }
  func.func @transform_3(%arg0: i32, %arg1: memref<1xi32, #tpu.memory_space<smem>>) -> (i32, i32) {
    %c0_i32 = arith.constant 0 : i32
    %c0_i32_0 = arith.constant 0 : i32
    return %arg0, %c0_i32 : i32, i32
  }
  func.func @transform_4(%arg0: i32, %arg1: memref<1xi32, #tpu.memory_space<smem>>) -> (i32, i32, i32) {
    %c0_i32 = arith.constant 0 : i32
    %c0_i32_0 = arith.constant 0 : i32
    %c0_i32_1 = arith.constant 0 : i32
    return %arg0, %c0_i32, %c0_i32_0 : i32, i32, i32
  }
  func.func @transform_5(%arg0: i32, %arg1: memref<1xi32, #tpu.memory_space<smem>>) -> (i32, i32, i32) {
    %c0_i32 = arith.constant 0 : i32
    %c0_i32_0 = arith.constant 0 : i32
    %c0_i32_1 = arith.constant 0 : i32
    return %arg0, %c0_i32, %c0_i32_0 : i32, i32, i32
  }
}

</mosaic_0001>

<llo_original>
// kernel: autoencoder_forward.3
$region0: #{autoencoder_forward.3}
  #allocation0 [shape = 'u32[]', space=smem, size = 0x4, offset = 0x4, fixed_abs, tag = 'smem constant byte address 0x4 - core index']
  #allocation1 [shape = 'u32[72,128]{1,0:T(1,128)}', space=vmem, size = 0x9000, scoped, tag = 'internal scratch']
  %s0 = inlined_call_operand.vmem [shape: f32[8,128], index: 0, kind: input, shape index: {}]
  %s1 = inlined_call_operand.vmem [shape: f32[1,128], index: 1, kind: input, shape index: {}]
  %s2 = inlined_call_operand.vmem [shape: f32[1,128], index: 2, kind: input, shape index: {}]
  %s3 = inlined_call_operand.vmem [shape: f32[1,128], index: 3, kind: input, shape index: {}]
  %s4 = inlined_call_operand.vmem [shape: f32[1,128], index: 4, kind: input, shape index: {}]
  %s5 = inlined_call_operand.vmem [shape: bf16[128,64], index: 5, kind: input, shape index: {}]
  %s6 = inlined_call_operand.vmem [shape: f32[1,64], index: 6, kind: input, shape index: {}]
  %s7 = inlined_call_operand.vmem [shape: bf16[64,128], index: 7, kind: input, shape index: {}]
  %s8 = inlined_call_operand.vmem [shape: f32[1,128], index: 8, kind: input, shape index: {}]
  %s9 = inlined_call_operand.vmem [shape: bf16[128,64], index: 9, kind: input, shape index: {}]
  %s10 = inlined_call_operand.vmem [shape: f32[1,64], index: 10, kind: input, shape index: {}]
  %s11 = inlined_call_operand.vmem [shape: bf16[64,128], index: 11, kind: input, shape index: {}]
  %s12 = inlined_call_operand.vmem [shape: f32[1,128], index: 12, kind: input, shape index: {}]
  %s13 = inlined_call_operand.vmem [shape: bf16[128,128], index: 13, kind: input, shape index: {}]
  %s14 = inlined_call_operand.vmem [shape: f32[1,128], index: 14, kind: input, shape index: {}]
  %s15 = inlined_call_operand.hbm [shape: f32[8,128], index: 15, kind: output, shape index: {0}]
  %s16 = inlined_call_operand.hbm [shape: f32[8,128], index: 16, kind: output, shape index: {1}]
  %17 = xla_tuple %s15, %s16
  %s18 = sld [smem:[#allocation0]]
  $region78: #{autoencoder_forward.3} parent=0
    _
  %s20 = ssub.s32 1, %s18
  %s21 = scalar_select 0, %s20, %s18
  $region1: #{autoencoder_forward.3} parent=0
    #allocation2 [shape = 'u8[4096]{0}', space=vmem, size = 0x1000, scoped, tag = 'output window, operand 0, single buffered']
    #allocation3 [shape = 's32[1]{0}', space=sflag, size = 0x4, scoped, tag = 'scoped memory for autoencoder_forward.3']
    #allocation4 [shape = 'u8[4096]{0}', space=vmem, size = 0x1000, scoped, tag = 'output window, operand 1, single buffered']
    #allocation5 [shape = 's32[1]{0}', space=sflag, size = 0x4, scoped, tag = 'scoped memory for autoencoder_forward.3']
    %22 = vsyncpa [#allocation3], 0
    %23 = vsyncpa [#allocation5], 0
    // Predicated region
    $region2: #{autoencoder_forward.3} parent=1 // pred_check
      _
    $region3: #{autoencoder_forward.3} parent=1 // pred_check_branch
      %25 = sbr.rel (0) target = $region5
    $region4: #{autoencoder_forward.3} parent=1 // pred_region
      _
    $region5: #{autoencoder_forward.3} parent=1 // pred_fallthru
      _
    // Predicated region
    $region6: #{autoencoder_forward.3} parent=1 // pred_check
      _
    $region7: #{autoencoder_forward.3} parent=1 // pred_check_branch
      %27 = sbr.rel (0) target = $region9
    $region8: #{autoencoder_forward.3} parent=1 // pred_region
      _
    $region9: #{autoencoder_forward.3} parent=1 // pred_fallthru
      _
    // Predicated region
    $region10: #{autoencoder_forward.3} parent=1 // pred_check
      _
    $region11: #{autoencoder_forward.3} parent=1 // pred_check_branch
      %29 = sbr.rel (0) target = $region13
    $region12: #{autoencoder_forward.3} parent=1 // pred_region
      _
    $region13: #{autoencoder_forward.3} parent=1 // pred_fallthru
      _
    // Predicated region
    $region14: #{autoencoder_forward.3} parent=1 // pred_check
      _
    $region15: #{autoencoder_forward.3} parent=1 // pred_check_branch
      %31 = sbr.rel (0) target = $region17
    $region16: #{autoencoder_forward.3} parent=1 // pred_region
      _
    $region17: #{autoencoder_forward.3} parent=1 // pred_fallthru
      _
    // Predicated region
    $region18: #{autoencoder_forward.3} parent=1 // pred_check
      _
    $region19: #{autoencoder_forward.3} parent=1 // pred_check_branch
      %33 = sbr.rel (0) target = $region21
    $region20: #{autoencoder_forward.3} parent=1 // pred_region
      _
    $region21: #{autoencoder_forward.3} parent=1 // pred_fallthru
      _
    // Predicated region
    $region22: #{autoencoder_forward.3} parent=1 // pred_check
      _
    $region23: #{autoencoder_forward.3} parent=1 // pred_check_branch
      %35 = sbr.rel (0) target = $region25
    $region24: #{autoencoder_forward.3} parent=1 // pred_region
      _
    $region25: #{autoencoder_forward.3} parent=1 // pred_fallthru
      _
    // Predicated region
    $region26: #{autoencoder_forward.3} parent=1 // pred_check
      _
    $region27: #{autoencoder_forward.3} parent=1 // pred_check_branch
      %37 = sbr.rel (0) target = $region29
    $region28: #{autoencoder_forward.3} parent=1 // pred_region
      _
    $region29: #{autoencoder_forward.3} parent=1 // pred_fallthru
      _
    // Predicated region
    $region30: #{autoencoder_forward.3} parent=1 // pred_check
      _
    $region31: #{autoencoder_forward.3} parent=1 // pred_check_branch
      %39 = sbr.rel (0) target = $region33
    $region32: #{autoencoder_forward.3} parent=1 // pred_region
      _
    $region33: #{autoencoder_forward.3} parent=1 // pred_fallthru
      _
    // Predicated region
    $region34: #{autoencoder_forward.3} parent=1 // pred_check
      _
    $region35: #{autoencoder_forward.3} parent=1 // pred_check_branch
      %41 = sbr.rel (0) target = $region37
    $region36: #{autoencoder_forward.3} parent=1 // pred_region
      _
    $region37: #{autoencoder_forward.3} parent=1 // pred_fallthru
      _
    // Predicated region
    $region38: #{autoencoder_forward.3} parent=1 // pred_check
      _
    $region39: #{autoencoder_forward.3} parent=1 // pred_check_branch
      %43 = sbr.rel (0) target = $region41
    $region40: #{autoencoder_forward.3} parent=1 // pred_region
      _
    $region41: #{autoencoder_forward.3} parent=1 // pred_fallthru
      _
    // Predicated region
    $region42: #{autoencoder_forward.3} parent=1 // pred_check
      _
    $region43: #{autoencoder_forward.3} parent=1 // pred_check_branch
      %45 = sbr.rel (0) target = $region45
    $region44: #{autoencoder_forward.3} parent=1 // pred_region
      _
    $region45: #{autoencoder_forward.3} parent=1 // pred_fallthru
      _
    // Predicated region
    $region46: #{autoencoder_forward.3} parent=1 // pred_check
      _
    $region47: #{autoencoder_forward.3} parent=1 // pred_check_branch
      %47 = sbr.rel (0) target = $region49
    $region48: #{autoencoder_forward.3} parent=1 // pred_region
      _
    $region49: #{autoencoder_forward.3} parent=1 // pred_fallthru
      _
    // Predicated region
    $region50: #{autoencoder_forward.3} parent=1 // pred_check
      _
    $region51: #{autoencoder_forward.3} parent=1 // pred_check_branch
      %49 = sbr.rel (0) target = $region53
    $region52: #{autoencoder_forward.3} parent=1 // pred_region
      _
    $region53: #{autoencoder_forward.3} parent=1 // pred_fallthru
      _
    // Predicated region
    $region54: #{autoencoder_forward.3} parent=1 // pred_check
      _
    $region55: #{autoencoder_forward.3} parent=1 // pred_check_branch
      %51 = sbr.rel (0) target = $region57
    $region56: #{autoencoder_forward.3} parent=1 // pred_region
      _
    $region57: #{autoencoder_forward.3} parent=1 // pred_fallthru
      _
    // Predicated region
    $region58: #{autoencoder_forward.3} parent=1 // pred_check
      _
    $region59: #{autoencoder_forward.3} parent=1 // pred_check_branch
      %53 = sbr.rel (0) target = $region61
    $region60: #{autoencoder_forward.3} parent=1 // pred_region
      _
    $region61: #{autoencoder_forward.3} parent=1 // pred_fallthru
      _
    %v55 = vld [vmem:[%s0] sm:$0xff]
    %v56 = vld [vmem:[%s1] sm:$0x1]
    %v58 = vperm.slane %v56, 0
    %v60 = vsub.f32 %v55, %v58
    %v61 = vld [vmem:[%s2] sm:$0x1]
    %v63 = vperm.slane %v61, 0
    %v65 = vmul.f32 %v60, %v63
    %v66 = vld [vmem:[%s3] sm:$0x1]
    %v68 = vperm.slane %v66, 0
    %v70 = vmul.f32 %v65, %v68
    %v71 = vld [vmem:[%s4] sm:$0x1]
    %v73 = vperm.slane %v71, 0
    %v75 = vadd.f32 %v70, %v73
    %v76 = vld [vmem:[%s5] sm:$0xf]
    %v77 = vld [vmem:[%s5 + $0x4] sm:$0xf]
    %v78 = vld [vmem:[%s5 + $0x8] sm:$0xf]
    %v79 = vld [vmem:[%s5 + $0xc] sm:$0xf]
    %v80 = vld [vmem:[%s5 + $0x10] sm:$0xf]
    %v81 = vld [vmem:[%s5 + $0x14] sm:$0xf]
    %v82 = vld [vmem:[%s5 + $0x18] sm:$0xf]
    %v83 = vld [vmem:[%s5 + $0x1c] sm:$0xf]
    %v84 = vld [vmem:[%s5 + $0x20] sm:$0xf]
    %v85 = vld [vmem:[%s5 + $0x24] sm:$0xf]
    %v86 = vld [vmem:[%s5 + $0x28] sm:$0xf]
    %v87 = vld [vmem:[%s5 + $0x2c] sm:$0xf]
    %v88 = vld [vmem:[%s5 + $0x30] sm:$0xf]
    %v89 = vld [vmem:[%s5 + $0x34] sm:$0xf]
    %v90 = vld [vmem:[%s5 + $0x38] sm:$0xf]
    %v91 = vld [vmem:[%s5 + $0x3c] sm:$0xf]
    %v92 = vpack.c.bf16 %v75, %v75
    %v93 = vld [vmem:[%s6] sm:$0x1]
    %v95 = vperm.slane %v93, 0
    %v113 = vunpack.c.l.b16 %v76
    %v114 = vunpack.c.l.b16 %v77
    %v115 = vunpack.c.l.b16 %v78
    %v116 = vunpack.c.l.b16 %v79
    %v117 = vunpack.c.l.b16 %v80
    %v118 = vunpack.c.l.b16 %v81
    %v119 = vunpack.c.l.b16 %v82
    %v120 = vunpack.c.l.b16 %v83
    %v121 = vunpack.c.l.b16 %v84
    %v122 = vunpack.c.l.b16 %v85
    %v123 = vunpack.c.l.b16 %v86
    %v124 = vunpack.c.l.b16 %v87
    %v125 = vunpack.c.l.b16 %v88
    %v126 = vunpack.c.l.b16 %v89
    %v127 = vunpack.c.l.b16 %v90
    %v128 = vunpack.c.l.b16 %v91
    %v129 = vpack.c.b16 %v114, %v113
    %v130 = vpack.c.b16 %v116, %v115
    %v131 = vpack.c.b16 %v118, %v117
    %v132 = vpack.c.b16 %v120, %v119
    %v133 = vpack.c.b16 %v122, %v121
    %v134 = vpack.c.b16 %v124, %v123
    %v135 = vpack.c.b16 %v126, %v125
    %v136 = vpack.c.b16 %v128, %v127
    %145 = vmatpush.bf16.msra.mxu0 %v136
    %146 = vmatpush.bf16.msra.mxu0 %v135
    %147 = vmatpush.bf16.msra.mxu0 %v134
    %148 = vmatpush.bf16.msra.mxu0 %v133
    %149 = vmatpush.bf16.msra.mxu0 %v132
    %150 = vmatpush.bf16.msra.mxu0 %v131
    %151 = vmatpush.bf16.msra.mxu0 %v130
    %152 = vmatpush.bf16.msra.mxu0 %v129
    %153 = vmatmul.bf16.gmra.mxu0 %v92
    %v154 = vpop.f32.mrf.mxu0
    %v155 = vadd.f32 %v95, %v154
    %v156 = vpop.f32.mrf.mxu0
    %157 = vdwg.mxu0
    %v158 = vmax.f32 %v155, 0.0
    %v159 = vld [vmem:[%s7] sm:$0xf]
    %v160 = vld [vmem:[%s7 + $0x4] sm:$0xf]
    %v161 = vld [vmem:[%s7 + $0x8] sm:$0xf]
    %v162 = vld [vmem:[%s7 + $0xc] sm:$0xf]
    %v163 = vld [vmem:[%s7 + $0x10] sm:$0xf]
    %v164 = vld [vmem:[%s7 + $0x14] sm:$0xf]
    %v165 = vld [vmem:[%s7 + $0x18] sm:$0xf]
    %v166 = vld [vmem:[%s7 + $0x1c] sm:$0xf]
    %v167 = vpack.c.bf16 %v158, %v158
    %v168 = vld [vmem:[%s8] sm:$0x1]
    %v170 = vperm.slane %v168, 0
    %v180 = vunpack.c.l.b16 %v159
    %v181 = vunpack.c.l.b16 %v160
    %v182 = vunpack.c.l.b16 %v161
    %v183 = vunpack.c.l.b16 %v162
    %v184 = vunpack.c.l.b16 %v163
    %v185 = vunpack.c.l.b16 %v164
    %v186 = vunpack.c.l.b16 %v165
    %v187 = vunpack.c.l.b16 %v166
    %v188 = vpack.c.b16 %v181, %v180
    %v189 = vpack.c.b16 %v183, %v182
    %v190 = vpack.c.b16 %v185, %v184
    %v191 = vpack.c.b16 %v187, %v186
    %vm196 = vcmask 523264
    %v198 = vsel %vm196, %v167, 0
    %200 = vmatpush.bf16.msra.mxu0 0
    %201 = vmatpush.bf16.msra.mxu0 0
    %202 = vmatpush.bf16.msra.mxu0 0
    %203 = vmatpush.bf16.msra.mxu0 0
    %204 = vmatpush.bf16.msra.mxu0 %v191
    %205 = vmatpush.bf16.msra.mxu0 %v190
    %206 = vmatpush.bf16.msra.mxu0 %v189
    %207 = vmatpush.bf16.msra.mxu0 %v188
    %208 = vmatmul.bf16.gmra.mxu0 %v198
    %v209 = vpop.f32.mrf.mxu0
    %v210 = vadd.f32 %v170, %v209
    %v211 = vpop.f32.mrf.mxu0
    %212 = vdwg.mxu0
    %213 = vst [vmem:[#allocation4] sm:$0xff] %v210
    %v214 = vld [vmem:[%s9] sm:$0xf]
    %v215 = vld [vmem:[%s9 + $0x4] sm:$0xf]
    %v216 = vld [vmem:[%s9 + $0x8] sm:$0xf]
    %v217 = vld [vmem:[%s9 + $0xc] sm:$0xf]
    %v218 = vld [vmem:[%s9 + $0x10] sm:$0xf]
    %v219 = vld [vmem:[%s9 + $0x14] sm:$0xf]
    %v220 = vld [vmem:[%s9 + $0x18] sm:$0xf]
    %v221 = vld [vmem:[%s9 + $0x1c] sm:$0xf]
    %v222 = vld [vmem:[%s9 + $0x20] sm:$0xf]
    %v223 = vld [vmem:[%s9 + $0x24] sm:$0xf]
    %v224 = vld [vmem:[%s9 + $0x28] sm:$0xf]
    %v225 = vld [vmem:[%s9 + $0x2c] sm:$0xf]
    %v226 = vld [vmem:[%s9 + $0x30] sm:$0xf]
    %v227 = vld [vmem:[%s9 + $0x34] sm:$0xf]
    %v228 = vld [vmem:[%s9 + $0x38] sm:$0xf]
    %v229 = vld [vmem:[%s9 + $0x3c] sm:$0xf]
    %v230 = vpack.c.bf16 %v210, %v210
    %v231 = vld [vmem:[%s10] sm:$0x1]
    %v233 = vperm.slane %v231, 0
    %v251 = vunpack.c.l.b16 %v214
    %v252 = vunpack.c.l.b16 %v215
    %v253 = vunpack.c.l.b16 %v216
    %v254 = vunpack.c.l.b16 %v217
    %v255 = vunpack.c.l.b16 %v218
    %v256 = vunpack.c.l.b16 %v219
    %v257 = vunpack.c.l.b16 %v220
    %v258 = vunpack.c.l.b16 %v221
    %v259 = vunpack.c.l.b16 %v222
    %v260 = vunpack.c.l.b16 %v223
    %v261 = vunpack.c.l.b16 %v224
    %v262 = vunpack.c.l.b16 %v225
    %v263 = vunpack.c.l.b16 %v226
    %v264 = vunpack.c.l.b16 %v227
    %v265 = vunpack.c.l.b16 %v228
    %v266 = vunpack.c.l.b16 %v229
    %v267 = vpack.c.b16 %v252, %v251
    %v268 = vpack.c.b16 %v254, %v253
    %v269 = vpack.c.b16 %v256, %v255
    %v270 = vpack.c.b16 %v258, %v257
    %v271 = vpack.c.b16 %v260, %v259
    %v272 = vpack.c.b16 %v262, %v261
    %v273 = vpack.c.b16 %v264, %v263
    %v274 = vpack.c.b16 %v266, %v265
    %283 = vmatpush.bf16.msra.mxu0 %v274
    %284 = vmatpush.bf16.msra.mxu0 %v273
    %285 = vmatpush.bf16.msra.mxu0 %v272
    %286 = vmatpush.bf16.msra.mxu0 %v271
    %287 = vmatpush.bf16.msra.mxu0 %v270
    %288 = vmatpush.bf16.msra.mxu0 %v269
    %289 = vmatpush.bf16.msra.mxu0 %v268
    %290 = vmatpush.bf16.msra.mxu0 %v267
    %291 = vmatmul.bf16.gmra.mxu0 %v230
    %v292 = vpop.f32.mrf.mxu0
    %v293 = vadd.f32 %v233, %v292
    %v294 = vpop.f32.mrf.mxu0
    %295 = vdwg.mxu0
    %v296 = vmax.f32 %v293, 0.0
    %v297 = vld [vmem:[%s11] sm:$0xf]
    %v298 = vld [vmem:[%s11 + $0x4] sm:$0xf]
    %v299 = vld [vmem:[%s11 + $0x8] sm:$0xf]
    %v300 = vld [vmem:[%s11 + $0xc] sm:$0xf]
    %v301 = vld [vmem:[%s11 + $0x10] sm:$0xf]
    %v302 = vld [vmem:[%s11 + $0x14] sm:$0xf]
    %v303 = vld [vmem:[%s11 + $0x18] sm:$0xf]
    %v304 = vld [vmem:[%s11 + $0x1c] sm:$0xf]
    %v305 = vpack.c.bf16 %v296, %v296
    %v306 = vld [vmem:[%s12] sm:$0x1]
    %v308 = vperm.slane %v306, 0
    %v318 = vunpack.c.l.b16 %v297
    %v319 = vunpack.c.l.b16 %v298
    %v320 = vunpack.c.l.b16 %v299
    %v321 = vunpack.c.l.b16 %v300
    %v322 = vunpack.c.l.b16 %v301
    %v323 = vunpack.c.l.b16 %v302
    %v324 = vunpack.c.l.b16 %v303
    %v325 = vunpack.c.l.b16 %v304
    %v326 = vpack.c.b16 %v319, %v318
    %v327 = vpack.c.b16 %v321, %v320
    %v328 = vpack.c.b16 %v323, %v322
    %v329 = vpack.c.b16 %v325, %v324
    %v335 = vsel %vm196, %v305, 0
    %337 = vmatpush.bf16.msra.mxu0 0
    %338 = vmatpush.bf16.msra.mxu0 0
    %339 = vmatpush.bf16.msra.mxu0 0
    %340 = vmatpush.bf16.msra.mxu0 0
    %341 = vmatpush.bf16.msra.mxu0 %v329
    %342 = vmatpush.bf16.msra.mxu0 %v328
    %343 = vmatpush.bf16.msra.mxu0 %v327
    %344 = vmatpush.bf16.msra.mxu0 %v326
    %345 = vmatmul.bf16.gmra.mxu0 %v335
    %v346 = vpop.f32.mrf.mxu0
    %v347 = vadd.f32 %v308, %v346
    %v348 = vpop.f32.mrf.mxu0
    %349 = vdwg.mxu0
    %v350 = vmax.f32 %v347, 0.0
    %v351 = vld [vmem:[%s13] sm:$0xf]
    %v352 = vld [vmem:[%s13 + $0x4] sm:$0xf]
    %v353 = vld [vmem:[%s13 + $0x8] sm:$0xf]
    %v354 = vld [vmem:[%s13 + $0xc] sm:$0xf]
    %v355 = vld [vmem:[%s13 + $0x10] sm:$0xf]
    %v356 = vld [vmem:[%s13 + $0x14] sm:$0xf]
    %v357 = vld [vmem:[%s13 + $0x18] sm:$0xf]
    %v358 = vld [vmem:[%s13 + $0x1c] sm:$0xf]
    %v359 = vld [vmem:[%s13 + $0x20] sm:$0xf]
    %v360 = vld [vmem:[%s13 + $0x24] sm:$0xf]
    %v361 = vld [vmem:[%s13 + $0x28] sm:$0xf]
    %v362 = vld [vmem:[%s13 + $0x2c] sm:$0xf]
    %v363 = vld [vmem:[%s13 + $0x30] sm:$0xf]
    %v364 = vld [vmem:[%s13 + $0x34] sm:$0xf]
    %v365 = vld [vmem:[%s13 + $0x38] sm:$0xf]
    %v366 = vld [vmem:[%s13 + $0x3c] sm:$0xf]
    %v367 = vpack.c.bf16 %v350, %v350
    %v368 = vld [vmem:[%s14] sm:$0x1]
    %v370 = vperm.slane %v368, 0
    %v388 = vunpack.c.l.b16 %v351
    %v389 = vunpack.c.l.b16 %v352
    %v390 = vunpack.c.l.b16 %v353
    %v391 = vunpack.c.l.b16 %v354
    %v392 = vunpack.c.l.b16 %v355
    %v393 = vunpack.c.l.b16 %v356
    %v394 = vunpack.c.l.b16 %v357
    %v395 = vunpack.c.l.b16 %v358
    %v396 = vunpack.c.l.b16 %v359
    %v397 = vunpack.c.l.b16 %v360
    %v398 = vunpack.c.l.b16 %v361
    %v399 = vunpack.c.l.b16 %v362
    %v400 = vunpack.c.l.b16 %v363
    %v401 = vunpack.c.l.b16 %v364
    %v402 = vunpack.c.l.b16 %v365
    %v403 = vunpack.c.l.b16 %v366
    %v404 = vpack.c.b16 %v389, %v388
    %v405 = vpack.c.b16 %v391, %v390
    %v406 = vpack.c.b16 %v393, %v392
    %v407 = vpack.c.b16 %v395, %v394
    %v408 = vpack.c.b16 %v397, %v396
    %v409 = vpack.c.b16 %v399, %v398
    %v410 = vpack.c.b16 %v401, %v400
    %v411 = vpack.c.b16 %v403, %v402
    %420 = vmatpush.bf16.msra.mxu0 %v411
    %421 = vmatpush.bf16.msra.mxu0 %v410
    %422 = vmatpush.bf16.msra.mxu0 %v409
    %423 = vmatpush.bf16.msra.mxu0 %v408
    %424 = vmatpush.bf16.msra.mxu0 %v407
    %425 = vmatpush.bf16.msra.mxu0 %v406
    %426 = vmatpush.bf16.msra.mxu0 %v405
    %427 = vmatpush.bf16.msra.mxu0 %v404
    %428 = vmatmul.bf16.gmra.mxu0 %v367
    %v429 = vpop.f32.mrf.mxu0
    %v430 = vadd.f32 %v370, %v429
    %v431 = vpop.f32.mrf.mxu0
    %432 = vdwg.mxu0
    %433 = vst [vmem:[#allocation2] sm:$0xff] %v430
    // Predicated region
    $region62: #{autoencoder_forward.3} parent=1 // pred_check
      _
    $region63: #{autoencoder_forward.3} parent=1 // pred_check_branch
      %435 = sbr.rel (0) target = $region65
    $region64: #{autoencoder_forward.3} parent=1 // pred_region
      %437 = vsyncadd [#allocation3], 0
      %s439 = sshll.u32 [#allocation2], 4
      %s440 = int_to_ptr.vmem [resolvable:$true] %s439
      %s441 = sshll.u32 %s15, 4
      %s442 = int_to_ptr.hbm [resolvable:$true] %s441
      %444 = dma.vmem_to_hbm [thread:$0]  %s440, 128, %s442, [#allocation3]
    $region65: #{autoencoder_forward.3} parent=1 // pred_fallthru
      _
    // Predicated region
    $region66: #{autoencoder_forward.3} parent=1 // pred_check
      _
    $region67: #{autoencoder_forward.3} parent=1 // pred_check_branch
      %446 = sbr.rel (0) target = $region69
    $region68: #{autoencoder_forward.3} parent=1 // pred_region
      %448 = vsyncadd [#allocation5], 0
      %s450 = sshll.u32 [#allocation4], 4
      %s451 = int_to_ptr.vmem [resolvable:$true] %s450
      %s452 = sshll.u32 %s16, 4
      %s453 = int_to_ptr.hbm [resolvable:$true] %s452
      %455 = dma.vmem_to_hbm [thread:$0]  %s451, 128, %s453, [#allocation5]
    $region69: #{autoencoder_forward.3} parent=1 // pred_fallthru
      _
    // Predicated region
    $region70: #{autoencoder_forward.3} parent=1 // pred_check
      _
    $region71: #{autoencoder_forward.3} parent=1 // pred_check_branch
      %457 = sbr.rel (0) target = $region73
    $region72: #{autoencoder_forward.3} parent=1 // pred_region
      %459 = dma.done [#allocation3], 128
    $region73: #{autoencoder_forward.3} parent=1 // pred_fallthru
      _
    // Predicated region
    $region74: #{autoencoder_forward.3} parent=1 // pred_check
      _
    $region75: #{autoencoder_forward.3} parent=1 // pred_check_branch
      %461 = sbr.rel (0) target = $region77
    $region76: #{autoencoder_forward.3} parent=1 // pred_region
      %463 = dma.done [#allocation5], 128
    $region77: #{autoencoder_forward.3} parent=1 // pred_fallthru
      _
    %464 = vsyncpa [#allocation3], 1
    %465 = vsyncpa [#allocation5], 1

// kernel: autoencoder_forward.2
$region0: #{autoencoder_forward.2}
  #allocation0 [shape = 'u32[]', space=smem, size = 0x4, offset = 0x4, fixed_abs, tag = 'smem constant byte address 0x4 - core index']
  #allocation1 [shape = 'u32[72,128]{1,0:T(1,128)}', space=vmem, size = 0x9000, scoped, tag = 'internal scratch']
  #allocation2 [shape = 's32[1]{0}', space=sflag, size = 0x4, scoped, tag = 'scoped memory for autoencoder_forward.2']
  #allocation3 [shape = 's32[1]{0:T(128)S(6)}', space=smem, size = 0x200, scoped, tag = 'prefetched SMEM operand 0']
  %s0 = inlined_call_operand.<no memory space> [shape: s32[1], index: 0, kind: input, shape index: {}]
  %s1 = inlined_call_operand.vmem [shape: f32[8,128], index: 1, kind: input, shape index: {}]
  %s2 = inlined_call_operand.vmem [shape: bf16[128,128], index: 2, kind: input, shape index: {}]
  %s3 = inlined_call_operand.vmem [shape: f32[1,128], index: 3, kind: input, shape index: {}]
  %s4 = inlined_call_operand.vmem [shape: f32[8,128], index: 4, kind: output, shape index: {0}]
  %s5 = inlined_call_operand.vmem [shape: f32[1,8,128], index: 5, kind: output, shape index: {1}]
  %s6 = inlined_call_operand.vmem [shape: f32[1,8,128], index: 6, kind: output, shape index: {2}]
  %7 = xla_tuple %s4, %s5, %s6
  %s8 = sld [smem:[#allocation0]]
  $region38: #{autoencoder_forward.2} parent=0
    _
  %s10 = ssub.s32 1, %s8
  %s11 = scalar_select 0, %s10, %s8
  %12 = sst [smem:[#allocation3]] %s0
  // Predicated region
  $region2: #{autoencoder_forward.2} parent=0 // pred_check
    _
  $region3: #{autoencoder_forward.2} parent=0 // pred_check_branch
    %14 = sbr.rel (0) target = $region5
  $region4: #{autoencoder_forward.2} parent=0 // pred_region
    _
  $region5: #{autoencoder_forward.2} parent=0 // pred_fallthru
    _
  // Predicated region
  $region6: #{autoencoder_forward.2} parent=0 // pred_check
    _
  $region7: #{autoencoder_forward.2} parent=0 // pred_check_branch
    %16 = sbr.rel (0) target = $region9
  $region8: #{autoencoder_forward.2} parent=0 // pred_region
    _
  $region9: #{autoencoder_forward.2} parent=0 // pred_fallthru
    _
  // Predicated region
  $region10: #{autoencoder_forward.2} parent=0 // pred_check
    _
  $region11: #{autoencoder_forward.2} parent=0 // pred_check_branch
    %18 = sbr.rel (0) target = $region13
  $region12: #{autoencoder_forward.2} parent=0 // pred_region
    _
  $region13: #{autoencoder_forward.2} parent=0 // pred_fallthru
    _
  %v19 = vld [vmem:[%s1] sm:$0xff]
  %v20 = vld [vmem:[%s2] sm:$0xf]
  %v21 = vld [vmem:[%s2 + $0x4] sm:$0xf]
  %v22 = vld [vmem:[%s2 + $0x8] sm:$0xf]
  %v23 = vld [vmem:[%s2 + $0xc] sm:$0xf]
  %v24 = vld [vmem:[%s2 + $0x10] sm:$0xf]
  %v25 = vld [vmem:[%s2 + $0x14] sm:$0xf]
  %v26 = vld [vmem:[%s2 + $0x18] sm:$0xf]
  %v27 = vld [vmem:[%s2 + $0x1c] sm:$0xf]
  %v28 = vld [vmem:[%s2 + $0x20] sm:$0xf]
  %v29 = vld [vmem:[%s2 + $0x24] sm:$0xf]
  %v30 = vld [vmem:[%s2 + $0x28] sm:$0xf]
  %v31 = vld [vmem:[%s2 + $0x2c] sm:$0xf]
  %v32 = vld [vmem:[%s2 + $0x30] sm:$0xf]
  %v33 = vld [vmem:[%s2 + $0x34] sm:$0xf]
  %v34 = vld [vmem:[%s2 + $0x38] sm:$0xf]
  %v35 = vld [vmem:[%s2 + $0x3c] sm:$0xf]
  %v36 = vpack.c.bf16 %v19, %v19
  %v37 = vld [vmem:[%s3] sm:$0x1]
  %v39 = vperm.slane %v37, 0
  %v57 = vunpack.c.l.b16 %v20
  %v58 = vunpack.c.l.b16 %v21
  %v59 = vunpack.c.l.b16 %v22
  %v60 = vunpack.c.l.b16 %v23
  %v61 = vunpack.c.l.b16 %v24
  %v62 = vunpack.c.l.b16 %v25
  %v63 = vunpack.c.l.b16 %v26
  %v64 = vunpack.c.l.b16 %v27
  %v65 = vunpack.c.l.b16 %v28
  %v66 = vunpack.c.l.b16 %v29
  %v67 = vunpack.c.l.b16 %v30
  %v68 = vunpack.c.l.b16 %v31
  %v69 = vunpack.c.l.b16 %v32
  %v70 = vunpack.c.l.b16 %v33
  %v71 = vunpack.c.l.b16 %v34
  %v72 = vunpack.c.l.b16 %v35
  %v73 = vpack.c.b16 %v58, %v57
  %v74 = vpack.c.b16 %v60, %v59
  %v75 = vpack.c.b16 %v62, %v61
  %v76 = vpack.c.b16 %v64, %v63
  %v77 = vpack.c.b16 %v66, %v65
  %v78 = vpack.c.b16 %v68, %v67
  %v79 = vpack.c.b16 %v70, %v69
  %v80 = vpack.c.b16 %v72, %v71
  %89 = vmatpush.bf16.msra.mxu0 %v80
  %90 = vmatpush.bf16.msra.mxu0 %v79
  %91 = vmatpush.bf16.msra.mxu0 %v78
  %92 = vmatpush.bf16.msra.mxu0 %v77
  %93 = vmatpush.bf16.msra.mxu0 %v76
  %94 = vmatpush.bf16.msra.mxu0 %v75
  %95 = vmatpush.bf16.msra.mxu0 %v74
  %96 = vmatpush.bf16.msra.mxu0 %v73
  %97 = vmatmul.bf16.gmra.mxu0 %v36
  %v98 = vpop.f32.mrf.mxu0
  %v99 = vadd.f32 %v39, %v98
  %v100 = vpop.f32.mrf.mxu0
  %101 = vdwg.mxu0
  %v102 = vmax.f32 %v99, 0.0
  %103 = vst [vmem:[%s4] sm:$0xff] %v102
  %v104 = vlaneseq
  %v105 = vshrl.u32 %v104, 7
  %s106 = smul.u32 0, 8
  %v107 = vstv %s106
  %v108 = vadd.s32 %v105, %v107
  %s109 = sld [smem:[#allocation3]]
  %v110 = vstv %s109
  %vm111 = vcmp.lt.s32.totalorder %v108, %v110
  %v112 = vsel %vm111, 1, 0
  %v113 = vcvt.s32.f32 %v112
  %v114 = vmul.f32 %v102, %v113
  %v115 = vrot.slane %v114, 4
  %v116 = vadd.f32 %v114, %v115
  %v117 = vrot.slane %v116, 2
  %v118 = vadd.f32 %v116, %v117
  %v119 = vrot.slane %v118, 1
  %v120 = vadd.f32 %v118, %v119
  %v121 = vmul.f32 %v114, %v114
  %v122 = vrot.slane %v121, 4
  %v123 = vadd.f32 %v121, %v122
  %v124 = vrot.slane %v123, 2
  %v125 = vadd.f32 %v123, %v124
  %v126 = vrot.slane %v125, 1
  %v127 = vadd.f32 %v125, %v126
  %128 = vst [vmem:[%s5] sm:$0xff] %v120
  %129 = vst [vmem:[%s6] sm:$0xff] %v127
  // Predicated region
  $region14: #{autoencoder_forward.2} parent=0 // pred_check
    _
  $region15: #{autoencoder_forward.2} parent=0 // pred_check_branch
    %131 = sbr.rel (0) target = $region17
  $region16: #{autoencoder_forward.2} parent=0 // pred_region
    _
  $region17: #{autoencoder_forward.2} parent=0 // pred_fallthru
    _
  // Predicated region
  $region18: #{autoencoder_forward.2} parent=0 // pred_check
    _
  $region19: #{autoencoder_forward.2} parent=0 // pred_check_branch
    %133 = sbr.rel (0) target = $region21
  $region20: #{autoencoder_forward.2} parent=0 // pred_region
    _
  $region21: #{autoencoder_forward.2} parent=0 // pred_fallthru
    _
  // Predicated region
  $region22: #{autoencoder_forward.2} parent=0 // pred_check
    _
  $region23: #{autoencoder_forward.2} parent=0 // pred_check_branch
    %135 = sbr.rel (0) target = $region25
  $region24: #{autoencoder_forward.2} parent=0 // pred_region
    _
  $region25: #{autoencoder_forward.2} parent=0 // pred_fallthru
    _
  // Predicated region
  $region26: #{autoencoder_forward.2} parent=0 // pred_check
    _
  $region27: #{autoencoder_forward.2} parent=0 // pred_check_branch
    %137 = sbr.rel (0) target = $region29
  $region28: #{autoencoder_forward.2} parent=0 // pred_region
    _
  $region29: #{autoencoder_forward.2} parent=0 // pred_fallthru
    _
  // Predicated region
  $region30: #{autoencoder_forward.2} parent=0 // pred_check
    _
  $region31: #{autoencoder_forward.2} parent=0 // pred_check_branch
    %139 = sbr.rel (0) target = $region33
  $region32: #{autoencoder_forward.2} parent=0 // pred_region
    _
  $region33: #{autoencoder_forward.2} parent=0 // pred_fallthru
    _
  // Predicated region
  $region34: #{autoencoder_forward.2} parent=0 // pred_check
    _
  $region35: #{autoencoder_forward.2} parent=0 // pred_check_branch
    %141 = sbr.rel (0) target = $region37
  $region36: #{autoencoder_forward.2} parent=0 // pred_region
    _
  $region37: #{autoencoder_forward.2} parent=0 // pred_fallthru
    _

</llo_original>
